<compile_context>
chip_gen: v7x
topology: tpu7x:2x2x1
jax: 0.10.0
libtpu: 0.0.40
codegen_flags: <defaults>
</compile_context>

<pallas_src>
import jax
import jax.numpy as jnp
from jax.experimental import pallas as pl
from jax.experimental.pallas import tpu as pltpu


def _choose_channel_tile(ch: int, hw: int, itemsize: int,
                         target_block_bytes: int = 2 * 1024 * 1024) -> int:
    """Pick the channel tile TC.

    TC must either equal the full channel-half dim (so the block equals the
    array dim) or be a divisor of it that is a multiple of the dtype's sublane
    tile (8 for 4-byte, 16 for 2-byte, 32 for 1-byte).  Among valid choices we
    take the largest whose merged (2, TC, HW) block stays <= target bytes.
    """
    sublane = max(8, 32 // max(1, itemsize))
    if ch % sublane != 0:
        return ch                      # block == full dim (always legal)
    best = sublane
    tc = sublane
    while tc <= ch:
        if ch % tc == 0 and 2 * tc * hw * itemsize <= target_block_bytes:
            best = tc
        tc += sublane
    return best


def _innercos_partial_kernel(x_ref, mask_ref, part_ref):
    # x_ref: (1, 2, TC, HW) -- former + target halves fetched in ONE DMA.
    x = x_ref[0]                              # (2, TC, HW)
    f = x[0].astype(jnp.float32)              # (TC, HW) former half
    t = x[1].astype(jnp.float32)              # (TC, HW) target half (raw)
    m = mask_ref[...].astype(jnp.float32)     # (1, HW), broadcast over channels

    d = f * m - t                             # strength factored out (wrapper applies it)
    # Per-block partial reduction (XLU has plenty of slack vs the HBM bound).
    # Note: HW is the full minor dim, so non-128-multiple lanes are handled by
    # Mosaic's masked reduction; test shapes keep HW a multiple of 128.
    partial = jnp.sum(d * d)

    # Disjoint, (8,128)-aligned, unmasked store of the block's partial sum.
    part_ref[...] = jnp.full(part_ref.shape, partial, dtype=jnp.float32)


def inner_cos_forward(in_data, mask, strength=1.0, skip=0,
                      target_block_bytes=2 * 1024 * 1024):
    """Pallas implementation of InnerCos.forward.

    Args:
      in_data:  (B, C, H, W) array (NCHW, like the PyTorch module), C even.
      mask:     (H, W) mask, broadcast over batch and channels.
      strength: scalar multiplier (applied outside the kernel; no retrace).
      skip:     if nonzero, loss is 0 and no kernel runs.
      target_block_bytes: tiling knob (per-step merged input block size).

    Returns:
      (output, loss): output == in_data (identity), loss = scalar MSE (f32).
    """
    B, C, H, W = in_data.shape
    assert C % 2 == 0, "InnerCos expects an even channel count"
    Ch = C // 2
    HW = H * W

    if skip:
        return in_data, jnp.float32(0.0)

    itemsize = in_data.dtype.itemsize
    TC = _choose_channel_tile(Ch, HW, itemsize, target_block_bytes)
    num_c_tiles = Ch // TC
    num_blocks = B * num_c_tiles

    # Metadata-only reshapes (no HBM copies):
    #   x[b, 0] = channels [0, Ch)  of batch b  (former)
    #   x[b, 1] = channels [Ch, 2Ch) of batch b (target)
    x = in_data.reshape(B, 2, Ch, HW)
    m2 = mask.reshape(1, HW)

    n_elems = B * Ch * HW

    # VMEM budget: 2 inputs-worth of double-buffered blocks + mask + out block,
    # with generous margin; capped so it is valid on v7x (64 MiB physical).
    block_in_bytes = 2 * TC * HW * itemsize
    mask_bytes = HW * m2.dtype.itemsize
    out_block_bytes = 8 * 128 * 4
    vmem_need = 2 * (block_in_bytes + mask_bytes + out_block_bytes)
    vmem_limit = int(min(32 * 1024 * 1024, max(8 * 1024 * 1024, 4 * vmem_need)))

    cost = pl.CostEstimate(
        flops=4 * n_elems,                    # mul, sub, mul, add per element
        transcendentals=0,
        bytes_accessed=(in_data.size * itemsize
                        + m2.size * m2.dtype.itemsize
                        + num_blocks * out_block_bytes),
    )

    partials = pl.pallas_call(
        _innercos_partial_kernel,
        out_shape=jax.ShapeDtypeStruct((num_blocks * 8, 128), jnp.float32),
        grid_spec=pltpu.PrefetchScalarGridSpec(
            num_scalar_prefetch=0,
            grid=(B, num_c_tiles),
            in_specs=[
                # former + target halves in one DMA per step.
                pl.BlockSpec((1, 2, TC, HW), lambda b, c: (b, 0, c, 0)),
                # mask: same block every step -> stays resident in VMEM.
                pl.BlockSpec((1, HW), lambda b, c: (0, 0)),
            ],
            out_specs=pl.BlockSpec(
                (8, 128), lambda b, c: (b * num_c_tiles + c, 0)),
        ),
        compiler_params=pltpu.CompilerParams(
            # Fully parallel grid: no cross-step deps, so v7x can shard the
            # HBM stream across both TensorCores (no effect on v5e/v6e).
            dimension_semantics=("parallel", "parallel"),
            vmem_limit_bytes=vmem_limit,
        ),
        cost_estimate=cost,
    )(x, m2)

    # Tiny wrapper-side reduction over one partial per grid block, then fold
    # strength^2 / N (mathematically identical: strength^2 factors out of MSE).
    per_block = partials.reshape(num_blocks, 8, 128)[:, 0, 0]
    scale = (float(strength) ** 2) / float(n_elems)
    loss = jnp.sum(per_block) * scale

    # Identity pass-through output, same as the PyTorch module.
    return in_data, loss


if __name__ == "__main__":
    key = jax.random.PRNGKey(0)
    k_x, k_m, k_x2 = jax.random.split(key, 3)

    # ---- Test 1: module-sized shapes, f32 ----
    B, C, H, W = 2, 4, 16, 16
    strength = 2.0
    in_data = jax.random.normal(k_x, (B, C, H, W), dtype=jnp.float32)
    # TODO(synk): util.cal_feat_mask (mask downsampling/thresholding in set_mask)
    # is host-side preprocessing in the original module and not part of this kernel.
    mask = (jax.random.uniform(k_m, (H, W)) > 0.5).astype(jnp.float32)

    out, loss = inner_cos_forward(in_data, mask, strength=strength, skip=0)
    out = jax.block_until_ready(out)
    loss = jax.block_until_ready(loss)

    Ch = C // 2
    former = in_data[:, :Ch]
    target = in_data[:, Ch:] * strength
    ref_loss = jnp.mean((former * mask[None, None] * strength - target) ** 2)

    assert out.shape == in_data.shape
    assert jnp.allclose(out, in_data)
    assert jnp.allclose(loss, ref_loss, rtol=1e-5, atol=1e-6), (loss, ref_loss)

    # ---- Test 2: force a multi-tile (B, Ch-tiles) grid via a small block budget ----
    B2, C2 = 2, 32
    x2 = jax.random.normal(k_x2, (B2, C2, H, W), dtype=jnp.float32)
    out2, loss2 = inner_cos_forward(x2, mask, strength=1.5, skip=0,
                                    target_block_bytes=16 * 1024)
    loss2 = jax.block_until_ready(loss2)
    Ch2 = C2 // 2
    ref2 = jnp.mean((x2[:, :Ch2] * mask[None, None] * 1.5 - x2[:, Ch2:] * 1.5) ** 2)
    assert jnp.allclose(loss2, ref2, rtol=1e-5, atol=1e-6), (loss2, ref2)

    # ---- Test 3: bf16 inputs (DMA stays bf16, compute in f32 inside the kernel) ----
    x3 = in_data.astype(jnp.bfloat16)
    out3, loss3 = inner_cos_forward(x3, mask, strength=strength, skip=0)
    loss3 = jax.block_until_ready(loss3)
    f3 = x3[:, :Ch].astype(jnp.float32)
    t3 = x3[:, Ch:].astype(jnp.float32) * strength
    ref3 = jnp.mean((f3 * mask[None, None] * strength - t3) ** 2)
    assert jnp.allclose(loss3, ref3, rtol=1e-3, atol=1e-4), (loss3, ref3)

    # ---- Skip path ----
    out_s, loss_s = inner_cos_forward(in_data, mask, strength=strength, skip=1)
    assert jnp.allclose(loss_s, 0.0)

    print("KERNEL_OK")
</pallas_src>

<mosaic_0001>
module attributes {stable_mosaic.version = 11 : i64} {
  func.func @_innercos_partial_kernel(%arg0: i32, %arg1: i32, %arg2: memref<1x2x2x256xf32, #tpu.memory_space<vmem>>, %arg3: memref<1x256xf32, #tpu.memory_space<vmem>>, %arg4: memref<8x128xf32, #tpu.memory_space<vmem>>) attributes {dimension_semantics = [#tpu.dimension_semantics<parallel>, #tpu.dimension_semantics<parallel>], iteration_bounds = array<i64: 2, 1>, scalar_prefetch = 0 : i64, scratch_operands = 0 : i64, tpu.core_type = #tpu.core_type<tc>, window_params = [{transform_indices = @transform_0, window_bounds = array<i64: 1, 2, 2, 256>}, {pipeline_mode = #tpu.pipeline_mode<synchronous>, transform_indices = @transform_1, window_bounds = array<i64: 1, 256>}, {transform_indices = @transform_2, window_bounds = array<i64: 8, 128>}]} {
    %c0 = arith.constant 0 : index
    %c0_0 = arith.constant 0 : index
    %c0_1 = arith.constant 0 : index
    %c0_2 = arith.constant 0 : index
    %0 = vector.load %arg2[%c0, %c0_0, %c0_1, %c0_2] : memref<1x2x2x256xf32, #tpu.memory_space<vmem>>, vector<1x2x2x256xf32>
    %1 = vector.shape_cast %0 : vector<1x2x2x256xf32> to vector<2x2x256xf32>
    %2 = vector.extract_strided_slice %1 {offsets = [0, 0, 0], sizes = [1, 2, 256], strides = [1, 1, 1]} : vector<2x2x256xf32> to vector<1x2x256xf32>
    %3 = vector.shape_cast %2 : vector<1x2x256xf32> to vector<2x256xf32>
    %4 = vector.extract_strided_slice %1 {offsets = [1, 0, 0], sizes = [1, 2, 256], strides = [1, 1, 1]} : vector<2x2x256xf32> to vector<1x2x256xf32>
    %5 = vector.shape_cast %4 : vector<1x2x256xf32> to vector<2x256xf32>
    %c0_3 = arith.constant 0 : index
    %c0_4 = arith.constant 0 : index
    %6 = vector.load %arg3[%c0_3, %c0_4] : memref<1x256xf32, #tpu.memory_space<vmem>>, vector<1x256xf32>
    %7 = vector.broadcast %6 : vector<1x256xf32> to vector<2x256xf32>
    %8 = arith.mulf %3, %7 : vector<2x256xf32>
    %9 = arith.subf %8, %5 : vector<2x256xf32>
    %10 = arith.mulf %9, %9 : vector<2x256xf32>
    %11 = vector.shape_cast %10 : vector<2x256xf32> to vector<1x2x256xf32>
    %cst = arith.constant dense<0.000000e+00> : vector<1xf32>
    %12 = vector.multi_reduction <add>, %11, %cst [1, 2] : vector<1x2x256xf32> to vector<1xf32>
    %13 = vector.shape_cast %12 : vector<1xf32> to vector<1x1x1xf32>
    %14 = vector.extract %13[0, 0, 0] : f32 from vector<1x1x1xf32>
    %15 = vector.broadcast %14 : f32 to vector<8x128xf32>
    %c0_5 = arith.constant 0 : index
    %c0_6 = arith.constant 0 : index
    %16 = vector.load %arg4[%c0_5, %c0_6] : memref<8x128xf32, #tpu.memory_space<vmem>>, vector<8x128xf32>
    tpu.vector_store %arg4[%c0_5, %c0_6], %15 {strides = array<i32>} : memref<8x128xf32, #tpu.memory_space<vmem>>, vector<8x128xf32>,
    return
  }
  func.func @transform_0(%arg0: i32, %arg1: i32) -> (i32, i32, i32, i32) {
    %c0_i32 = arith.constant 0 : i32
    %c0_i32_0 = arith.constant 0 : i32
    %c0_i32_1 = arith.constant 0 : i32
    return %arg0, %c0_i32, %arg1, %c0_i32_0 : i32, i32, i32, i32
  }
  func.func @transform_1(%arg0: i32, %arg1: i32) -> (i32, i32) {
    %c0_i32 = arith.constant 0 : i32
    %c0_i32_0 = arith.constant 0 : i32
    %c0_i32_1 = arith.constant 0 : i32
    return %c0_i32, %c0_i32_0 : i32, i32
  }
  func.func @transform_2(%arg0: i32, %arg1: i32) -> (i32, i32) {
    %c1_i32 = arith.constant 1 : i32
    %0 = arith.muli %arg0, %c1_i32 : i32
    %1 = arith.addi %0, %arg1 : i32
    %c0_i32 = arith.constant 0 : i32
    %c0_i32_0 = arith.constant 0 : i32
    return %1, %c0_i32 : i32, i32
  }
}

</mosaic_0001>

<llo_original>
// kernel: tpu_custom_call.1
$region0: #{tpu_custom_call.1}
  #allocation0 [shape = 'u32[]', space=smem, size = 0x4, offset = 0x4, fixed_abs, tag = 'smem constant byte address 0x4 - core index']
  #allocation1 [shape = 'u32[144,128]{1,0:T(1,128)}', space=vmem, size = 0x12000, scoped, tag = 'internal scratch']
  %s0 = inlined_call_operand.hbm [shape: f32[2,2,2,256], index: 0, kind: input, shape index: {}]
  %s1 = inlined_call_operand.vmem [shape: f32[1,256], index: 1, kind: input, shape index: {}]
  %s2 = inlined_call_operand.hbm [shape: f32[16,128], index: 2, kind: output, shape index: {}]
  %s3 = sld [smem:[#allocation0]]
  $region45: #{tpu_custom_call.1} parent=0
    _
  %s5 = ssub.s32 1, %s3
  %s6 = scalar_select 0, %s5, %s3
  $region1: #{tpu_custom_call.1} parent=0
    #allocation2 [shape = 'u8[8192]{0}', space=vmem, size = 0x2000, scoped, tag = 'input window, operand 0']
    #allocation3 [shape = 's32[2]{0}', space=sflag, size = 0x8, scoped, tag = 'scoped memory for tpu_custom_call.1']
    #allocation4 [shape = 's32[2]{0}', space=sflag, size = 0x8, scoped, tag = 'scoped memory for tpu_custom_call.1']
    #allocation5 [shape = 'u8[8192]{0}', space=vmem, size = 0x2000, scoped, tag = 'output window, operand 0']
    %7 = vsyncpa [#allocation3], 0
    %s8 = scalar_lea.sflag [#allocation3], 1
    %9 = vsyncpa %s8, 0
    %10 = vsyncpa [#allocation4], 0
    %s11 = scalar_lea.sflag [#allocation4], 1
    %12 = vsyncpa %s11, 0
    loop: start=0, step=1, limit=4
    $region2: #{tpu_custom_call.1} parent=1 // loop_pre_header
      _
    $region3: #{tpu_custom_call.1} parent=1 // loop_header
      %s14 = sphi 0, %s18
      %p15 = scmp.ge.s32.totalorder %s14, 4
      %s21 = sphi 0, %s33
      %s22 = sphi 0, %s29
      %s23 = sphi 0, %s21
      %s24 = sphi 0, %s22
      %s25 = sphi 0, %s23
      %s26 = sphi 0, %s24
      %s38 = sphi 0, %s40
      %s41 = sphi 0, %s38
      %s42 = sphi 0, %s41
      %s58 = sphi 0, %s42
      %s62 = sphi 0, %s62
      %s64 = sphi 0, %s62
      %s65 = sphi 0, %s64
      %s79 = sphi 0, %s65
      %s87 = sphi 0, %s89
      %s90 = sphi 0, %s87
      %s91 = sphi 0, %s90
      %s107 = sphi 0, %s91
    $region4: #{tpu_custom_call.1} parent=1 // loop_header_branch
      %17 = sbr.rel (%p15) target = $region8
    $region5: #{tpu_custom_call.1} parent=1 // loop_body
      %s19 = ssub.s32 %s14, 1
      %s20 = ssub.s32 %s14, 2
      %s27 = sadd.s32 1, %s22
      %p28 = scmp.ge.s32.totalorder %s27, 1
      %s29 = scalar_select %p28, 0, %s27
      %s30 = sadd.s32 1, %s21
      %s31 = scalar_select %p28, %s30, %s21
      %p32 = scmp.ge.s32.totalorder %s31, 2
      %s33 = scalar_select %p32, 0, %s31
      %s34 = ssub.s32 %s21, %s33
      %s35 = ssub.s32 %s22, %s29
      %s36 = sor.u32 %s34, %s35
      %p37 = scmp.eq.s32.totalorder %s36, 0
      %s39 = sadd.s32 %s38, 1
      %s40 = scalar_select %p37, %s38, %s39
      %p43 = pneg %p37
      %p44 = scmp.eq.s32.totalorder %s14, 1
      %p45 = por %p43, %p44
      %p46 = scmp.ne.s32.totalorder %s38, %s41
      %p47 = scmp.eq.s32.totalorder %s14, 0
      %p48 = por %p46, %p47
      %p49 = scmp.ne.s32.totalorder %s38, %s41
      %p50 = scmp.eq.s32.totalorder %s19, 1
      %p51 = por %p49, %p50
      %p52 = scmp.ne.s32.totalorder %s41, %s42
      %p53 = scmp.eq.s32.totalorder %s19, 0
      %p54 = por %p52, %p53
      %p55 = scmp.ne.s32.totalorder %s41, %s42
      %p56 = scmp.eq.s32.totalorder %s20, 1
      %p57 = por %p55, %p56
      %p59 = scmp.ne.s32.totalorder %s42, %s58
      %p60 = scmp.eq.s32.totalorder %s20, 0
      %p61 = por %p59, %p60
      %s63 = sadd.s32 %s62, 1
      %p66 = scmp.eq.s32.totalorder %s14, 1
      %p67 = scmp.ne.s32.totalorder %s62, %s64
      %p68 = scmp.eq.s32.totalorder %s14, 0
      %p69 = por %p67, %p68
      %p70 = scmp.ne.s32.totalorder %s62, %s64
      %p71 = scmp.eq.s32.totalorder %s19, 1
      %p72 = por %p70, %p71
      %p73 = scmp.ne.s32.totalorder %s64, %s65
      %p74 = scmp.eq.s32.totalorder %s19, 0
      %p75 = por %p73, %p74
      %p76 = scmp.ne.s32.totalorder %s64, %s65
      %p77 = scmp.eq.s32.totalorder %s20, 1
      %p78 = por %p76, %p77
      %p80 = scmp.ne.s32.totalorder %s65, %s79
      %p81 = scmp.eq.s32.totalorder %s20, 0
      %p82 = por %p80, %p81
      %s83 = sadd.s32 %s21, %s22
      %s84 = sadd.s32 %s33, %s29
      %s85 = ssub.s32 %s83, %s84
      %p86 = scmp.eq.s32.totalorder %s85, 0
      %s88 = sadd.s32 %s87, 1
      %s89 = scalar_select %p86, %s87, %s88
      %p92 = pneg %p86
      %p93 = scmp.eq.s32.totalorder %s14, 1
      %p94 = por %p92, %p93
      %p95 = scmp.ne.s32.totalorder %s87, %s90
      %p96 = scmp.eq.s32.totalorder %s14, 0
      %p97 = por %p95, %p96
      %p98 = scmp.ne.s32.totalorder %s87, %s90
      %p99 = scmp.eq.s32.totalorder %s19, 1
      %p100 = por %p98, %p99
      %p101 = scmp.ne.s32.totalorder %s90, %s91
      %p102 = scmp.eq.s32.totalorder %s19, 0
      %p103 = por %p101, %p102
      %p104 = scmp.ne.s32.totalorder %s90, %s91
      %p105 = scmp.eq.s32.totalorder %s20, 1
      %p106 = por %p104, %p105
      %p108 = scmp.ne.s32.totalorder %s91, %s107
      %p109 = scmp.eq.s32.totalorder %s20, 0
      %p110 = por %p108, %p109
      %p111 = scmp.le.s32.totalorder 1, %s14
      %p112 = scmp.lt.s32.totalorder %s14, 3
      %p113 = pnand %p111, %p112
      %p114 = pneg %p113
      // Predicated region
      $region9: #{tpu_custom_call.1} parent=5 // pred_check
        _
      $region10: #{tpu_custom_call.1} parent=5 // pred_check_branch
        %116 = sbr.rel (%p113) target = $region12
      $region11: #{tpu_custom_call.1} parent=5 // pred_region
        %s117 = ssub.s32 %s14, 1
        // Predicated region
        $region13: #{tpu_custom_call.1} parent=11 // pred_check
          %p118 = pneg %p75
        $region14: #{tpu_custom_call.1} parent=11 // pred_check_branch
          %120 = sbr.rel (%p118) target = $region16
        $region15: #{tpu_custom_call.1} parent=11 // pred_region
          _
        $region16: #{tpu_custom_call.1} parent=11 // pred_fallthru
          _
      $region12: #{tpu_custom_call.1} parent=5 // pred_fallthru
        _
      %p121 = scmp.lt.s32.totalorder %s14, 2
      // Predicated region
      $region17: #{tpu_custom_call.1} parent=5 // pred_check
        %p122 = pneg %p121
      $region18: #{tpu_custom_call.1} parent=5 // pred_check_branch
        %124 = sbr.rel (%p122) target = $region20
      $region19: #{tpu_custom_call.1} parent=5 // pred_region
        // Predicated region
        $region21: #{tpu_custom_call.1} parent=19 // pred_check
          %p125 = pneg %p48
        $region22: #{tpu_custom_call.1} parent=19 // pred_check_branch
          %127 = sbr.rel (%p125) target = $region24
        $region23: #{tpu_custom_call.1} parent=19 // pred_region
          %s128 = sand.u32 %s38, 1
          %s129 = scalar_lea.sflag [#allocation3], %s128
          %s130 = sand.u32 %s38, 1
          %s131 = smul.addr %s130, 8
          %s132 = scalar_lea.vmem [#allocation2], %s131
          %s134 = ssub.s32 128, 128
          %135 = vsyncadd %s129, %s134
          %s136 = smul.addr %s22, 2
          %s137 = smul.addr %s21, 4
          %s138 = sadd.s32 %s136, %s137
          %s139 = smul.addr %s138, 32
          %s140 = scalar_lea.hbm %s0, %s139
          %s141 = sshll.u32 %s132, 4
          %s142 = int_to_ptr.vmem [resolvable:$true] %s141
          %147 = dma.hbm_to_vmem [thread:$0]  %s140, 128, %s142, %s129, 64, 64, 4
        $region24: #{tpu_custom_call.1} parent=19 // pred_fallthru
          _
      $region20: #{tpu_custom_call.1} parent=5 // pred_fallthru
        _
      %p148 = scmp.le.s32.totalorder 1, %s14
      %p149 = scmp.lt.s32.totalorder %s14, 3
      %p150 = pnand %p148, %p149
      %p151 = pneg %p150
      // Predicated region
      $region25: #{tpu_custom_call.1} parent=5 // pred_check
        _
      $region26: #{tpu_custom_call.1} parent=5 // pred_check_branch
        %153 = sbr.rel (%p150) target = $region28
      $region27: #{tpu_custom_call.1} parent=5 // pred_region
        %s154 = ssub.s32 %s14, 1
        %s155 = sand.u32 %s41, 1
        %s156 = scalar_lea.sflag [#allocation3], %s155
        %s157 = sand.u32 %s41, 1
        %s158 = smul.addr %s157, 8
        %s159 = scalar_lea.vmem [#allocation2], %s158
        // Predicated region
        $region29: #{tpu_custom_call.1} parent=27 // pred_check
          %p160 = pneg %p54
        $region30: #{tpu_custom_call.1} parent=27 // pred_check_branch
          %162 = sbr.rel (%p160) target = $region32
        $region31: #{tpu_custom_call.1} parent=27 // pred_region
          %163 = dma.done %s156, 128
        $region32: #{tpu_custom_call.1} parent=27 // pred_fallthru
          _
        %s164 = sand.u32 %s41, 1
        %s165 = scalar_lea.sflag [#allocation3], %s164
        %s166 = sand.u32 %s41, 1
        %s167 = smul.addr %s166, 8
        %s168 = scalar_lea.vmem [#allocation2], %s167
        %p169 = pneg %p54
        %p170 = pneg %p51
        %p171 = pneg %p75
        %p172 = pneg %p72
        %p173 = pneg %p103
        %p174 = pneg %p100
        %s175 = sand.u32 %s90, 1
        %s176 = scalar_lea.sflag [#allocation4], %s175
        %s177 = sand.u32 %s90, 1
        %s178 = smul.addr %s177, 8
        %s179 = scalar_lea.vmem [#allocation5], %s178
        %s180 = sadd.s32 %s23, %s24
        %v181 = vld [vmem:[%s159] sm:$0xf]
        %v182 = vld [vmem:[%s159 + $0x4] sm:$0xf]
        %v183 = vld [vmem:[%s1] sm:$0x3]
        %v185 = vlaneseq
        %v186 = vshrl.u32 %v185, 7
        %v187 = vsub.s32 0, %v186
        %v188 = vrot.slane %v183, %v187
        %v189 = vlaneseq
        %v190 = vshrl.u32 %v189, 7
        %v191 = vsub.s32 1, %v190
        %v192 = vrot.slane %v183, %v191
        %v193 = vcombine.low %v188, %v192
        %v195 = vunpack.c.l.s4 1983009808
        %v196 = vunpack.c.0.s8 %v195
        %v197 = vlaneseq
        %v198 = vshrl.u32 %v197, 7
        %v199 = vsub.s32 %v196, %v198
        %v200 = vrot.slane %v193, %v199
        %v202 = vmul.f32 %v181, %v200
        %v203 = vsub.f32 %v202, %v182
        %v204 = vmul.f32 %v203, %v203
        %v207 = vunpack.c.l.s4 1983009808
        %v208 = vunpack.c.0.s8 %v207
        %v209 = vlaneseq
        %v210 = vshrl.u32 %v209, 7
        %v211 = vsub.s32 %v208, %v210
        %v212 = vrot.slane %v204, %v211
        %v213 = vcombine.high %v212, %v212
        %vm216 = vcmask 1041408
        %v217 = vsel %vm216, %v212, 0.0
        %v218 = vsel %vm216, %v213, 0.0
        %v219 = vadd.f32 %v217, %v218
        %220 = vadd.xlane.f32.xlu0 %v219
        %v221 = vpop.xlane.xlu0 %220
        %v222 = vrot.slane %v221, 4
        %v223 = vadd.f32 %v221, %v222
        %v224 = vrot.slane %v223, 2
        %v225 = vadd.f32 %v223, %v224
        %v226 = vrot.slane %v225, 1
        %v227 = vadd.f32 %v225, %v226
        %s228 = vtos %v227
        %v229 = vstv %s228
        %230 = vst [vmem:[%s179] sm:$0xff] %v229
        %s231 = sand.u32 %s90, 1
        %s232 = scalar_lea.sflag [#allocation4], %s231
        %s233 = sand.u32 %s90, 1
        %s234 = smul.addr %s233, 8
        %s235 = scalar_lea.vmem [#allocation5], %s234
        // Predicated region
        $region33: #{tpu_custom_call.1} parent=27 // pred_check
          %p236 = pneg %p100
        $region34: #{tpu_custom_call.1} parent=27 // pred_check_branch
          %238 = sbr.rel (%p236) target = $region36
        $region35: #{tpu_custom_call.1} parent=27 // pred_region
          %s239 = sadd.s32 %s23, %s24
          %s241 = ssub.s32 128, 128
          %242 = vsyncadd %s232, %s241
          %s243 = smul.addr %s239, 128
          %s244 = scalar_lea.hbm %s2, %s243
          %s246 = sshll.u32 %s235, 4
          %s247 = int_to_ptr.vmem [resolvable:$true] %s246
          %249 = dma.vmem_to_hbm [thread:$0]  %s247, 128, %s244, %s232
        $region36: #{tpu_custom_call.1} parent=27 // pred_fallthru
          _
      $region28: #{tpu_custom_call.1} parent=5 // pred_fallthru
        _
      %p250 = scmp.le.s32.totalorder 2, %s14
      // Predicated region
      $region37: #{tpu_custom_call.1} parent=5 // pred_check
        %p251 = pneg %p250
      $region38: #{tpu_custom_call.1} parent=5 // pred_check_branch
        %253 = sbr.rel (%p251) target = $region40
      $region39: #{tpu_custom_call.1} parent=5 // pred_region
        %s254 = ssub.s32 %s14, 2
        // Predicated region
        $region41: #{tpu_custom_call.1} parent=39 // pred_check
          %p255 = pneg %p106
        $region42: #{tpu_custom_call.1} parent=39 // pred_check_branch
          %257 = sbr.rel (%p255) target = $region44
        $region43: #{tpu_custom_call.1} parent=39 // pred_region
          %s258 = sand.u32 %s91, 1
          %s259 = scalar_lea.sflag [#allocation4], %s258
          %s260 = sand.u32 %s91, 1
          %s261 = smul.addr %s260, 8
          %s262 = scalar_lea.vmem [#allocation5], %s261
          %263 = dma.done %s259, 128
        $region44: #{tpu_custom_call.1} parent=39 // pred_fallthru
          _
      $region40: #{tpu_custom_call.1} parent=5 // pred_fallthru
        _
    $region6: #{tpu_custom_call.1} parent=1 // loop_footer
      %s18 = sadd.s32 1, %s14
    $region7: #{tpu_custom_call.1} parent=1 // loop_footer_branch
      %13 = sbr.rel target = $region3
    $region8: #{tpu_custom_call.1} parent=1 // loop_exit
      _
    %264 = vsyncpa [#allocation3], 1
    %s265 = scalar_lea.sflag [#allocation3], 1
    %266 = vsyncpa %s265, 1
    %267 = vsyncpa [#allocation4], 1
    %s268 = scalar_lea.sflag [#allocation4], 1
    %269 = vsyncpa %s268, 1

</llo_original>
